<compile_context>
chip_gen: v7x
topology: tpu7x:2x2x1
jax: 0.10.0
libtpu: 0.0.40
codegen_flags: <defaults>
</compile_context>

<pallas_src>
import functools

import jax
import jax.numpy as jnp
from jax.experimental import pallas as pl
from jax.experimental.pallas import tpu as pltpu


def _round_up(n, m):
    return ((n + m - 1) // m) * m


def policy_net_kernel(x_ref, w1_ref, b1_ref, w2_ref, b2_ref, out_ref):
    # Hot path: two MXU matmuls + VPU bias-add/ReLU on one batch tile.
    x = x_ref[...]                                        # (TB, S_pad)
    h = jnp.dot(x, w1_ref[...],
                preferred_element_type=jnp.float32)       # (TB, H)
    h = jnp.maximum(h + b1_ref[...], 0.0)                 # bias + ReLU (f32 VPU)
    o = jnp.dot(h, w2_ref[...],
                preferred_element_type=jnp.float32)       # (TB, A_pad) lane-dense
    out_ref[...] = (o + b2_ref[...]).astype(out_ref.dtype)


@functools.partial(jax.jit, static_argnames=("block_b",))
def policy_net_forward(x, w1, b1, w2, b2, *, block_b=512):
    B, S = x.shape
    H = w1.shape[1]
    A = w2.shape[1]

    # Wrapper-side (one-time) alignment padding.
    S_pad = _round_up(max(S, 8), 8)        # K of matmul 1: unmasked sublane loads
    A_pad = _round_up(max(A, 128), 128)    # lane-dense output stores
    TB = min(block_b, _round_up(B, 8))     # batch tile (sublane-aligned)
    B_pad = _round_up(B, TB)
    grid = (B_pad // TB,)

    f32 = jnp.float32
    x_p = jnp.zeros((B_pad, S_pad), f32).at[:B, :S].set(x.astype(f32))
    w1_p = jnp.zeros((S_pad, H), f32).at[:S, :].set(w1.astype(f32))
    b1_p = b1.astype(f32).reshape(1, H)
    w2_p = jnp.zeros((H, A_pad), f32).at[:, :A].set(w2.astype(f32))
    b2_p = jnp.zeros((1, A_pad), f32).at[:, :A].set(b2.astype(f32).reshape(1, A))

    cost = pl.CostEstimate(
        flops=2 * B_pad * S_pad * H + 2 * B_pad * H * A_pad,
        transcendentals=0,
        bytes_accessed=4 * (B_pad * S_pad + S_pad * H + H
                            + H * A_pad + A_pad + B_pad * A_pad),
    )

    out_p = pl.pallas_call(
        policy_net_kernel,
        out_shape=jax.ShapeDtypeStruct((B_pad, A_pad), f32),
        grid=grid,
        in_specs=[
            # Streamed per batch tile.
            pl.BlockSpec((TB, S_pad), lambda i: (i, 0)),
            # Weights/biases: constant block index -> VMEM-resident across tiles.
            pl.BlockSpec((S_pad, H), lambda i: (0, 0)),
            pl.BlockSpec((1, H), lambda i: (0, 0)),
            pl.BlockSpec((H, A_pad), lambda i: (0, 0)),
            pl.BlockSpec((1, A_pad), lambda i: (0, 0)),
        ],
        out_specs=pl.BlockSpec((TB, A_pad), lambda i: (i, 0)),
        compiler_params=pltpu.CompilerParams(
            dimension_semantics=("parallel",),   # shards batch tiles across TCs on v7x
        ),
        cost_estimate=cost,
    )(x_p, w1_p, b1_p, w2_p, b2_p)

    # Strip batch + lane padding.
    return out_p[:B, :A]


def init_params(key, state_dim, action_dim, hidden_dim=32):
    # Deterministic synthetic init (PyTorch-style uniform fan-in bound).
    k1, k2, k3, k4 = jax.random.split(key, 4)
    bound1 = 1.0 / jnp.sqrt(state_dim)
    bound2 = 1.0 / jnp.sqrt(hidden_dim)
    w1 = jax.random.uniform(k1, (state_dim, hidden_dim), jnp.float32, -bound1, bound1)
    b1 = jax.random.uniform(k2, (1, hidden_dim), jnp.float32, -bound1, bound1)
    w2 = jax.random.uniform(k3, (hidden_dim, action_dim), jnp.float32, -bound2, bound2)
    b2 = jax.random.uniform(k4, (1, action_dim), jnp.float32, -bound2, bound2)
    return w1, b1, w2, b2


def _reference(x, w1, b1, w2, b2):
    return jnp.maximum(x @ w1 + b1, 0.0) @ w2 + b2


if __name__ == "__main__":
    key = jax.random.PRNGKey(0)
    state_dim, action_dim, hidden_dim = 4, 2, 32
    kx, kp, kbig = jax.random.split(key, 3)
    w1, b1, w2, b2 = init_params(kp, state_dim, action_dim, hidden_dim)

    # 1) Small per-env-step batch (matches the PPO use case).
    batch = 8
    x = jax.random.normal(kx, (batch, state_dim), jnp.float32)
    out = jax.block_until_ready(policy_net_forward(x, w1, b1, w2, b2))
    ref = _reference(x, w1, b1, w2, b2)
    assert out.shape == (batch, action_dim)
    assert jnp.allclose(out, ref, atol=1e-5, rtol=1e-5)

    # 2) Larger rollout batch exercising the batch grid + padding path.
    big_batch = 2000                      # -> TB=512, B_pad=2048, grid=(4,)
    x_big = jax.random.normal(kbig, (big_batch, state_dim), jnp.float32)
    out_big = jax.block_until_ready(policy_net_forward(x_big, w1, b1, w2, b2))
    ref_big = _reference(x_big, w1, b1, w2, b2)
    assert out_big.shape == (big_batch, action_dim)
    assert jnp.allclose(out_big, ref_big, atol=1e-5, rtol=1e-5)

    print("KERNEL_OK")
</pallas_src>

<mosaic_0001>
module attributes {stable_mosaic.version = 11 : i64} {
  func.func @policy_net_kernel(%arg0: i32, %arg1: memref<8x8xf32, #tpu.memory_space<vmem>>, %arg2: memref<8x32xf32, #tpu.memory_space<vmem>>, %arg3: memref<1x32xf32, #tpu.memory_space<vmem>>, %arg4: memref<32x128xf32, #tpu.memory_space<vmem>>, %arg5: memref<1x128xf32, #tpu.memory_space<vmem>>, %arg6: memref<8x128xf32, #tpu.memory_space<vmem>>) attributes {dimension_semantics = [#tpu.dimension_semantics<parallel>], iteration_bounds = array<i64: 1>, scalar_prefetch = 0 : i64, scratch_operands = 0 : i64, tpu.core_type = #tpu.core_type<tc>, window_params = [{transform_indices = @transform_0, window_bounds = array<i64: 8, 8>}, {pipeline_mode = #tpu.pipeline_mode<synchronous>, transform_indices = @transform_1, window_bounds = array<i64: 8, 32>}, {pipeline_mode = #tpu.pipeline_mode<synchronous>, transform_indices = @transform_2, window_bounds = array<i64: 1, 32>}, {pipeline_mode = #tpu.pipeline_mode<synchronous>, transform_indices = @transform_3, window_bounds = array<i64: 32, 128>}, {pipeline_mode = #tpu.pipeline_mode<synchronous>, transform_indices = @transform_4, window_bounds = array<i64: 1, 128>}, {transform_indices = @transform_5, window_bounds = array<i64: 8, 128>}]} {
    %c0 = arith.constant 0 : index
    %c0_0 = arith.constant 0 : index
    %0 = vector.load %arg1[%c0, %c0_0] : memref<8x8xf32, #tpu.memory_space<vmem>>, vector<8x8xf32>
    %c0_1 = arith.constant 0 : index
    %c0_2 = arith.constant 0 : index
    %1 = vector.load %arg2[%c0_1, %c0_2] : memref<8x32xf32, #tpu.memory_space<vmem>>, vector<8x32xf32>
    %cst = arith.constant dense<0.000000e+00> : vector<8x32xf32>
    %2 = tpu.matmul %0, %1, %cst {dimension_numbers = #tpu.dot_dimension_numbers<[1], [0], [0], [1], [0, 0, 1, 1], [], []>} : vector<8x8xf32>, vector<8x32xf32>, vector<8x32xf32> -> vector<8x32xf32>
    %c0_3 = arith.constant 0 : index
    %c0_4 = arith.constant 0 : index
    %3 = vector.load %arg3[%c0_3, %c0_4] : memref<1x32xf32, #tpu.memory_space<vmem>>, vector<1x32xf32>
    %4 = vector.broadcast %3 : vector<1x32xf32> to vector<8x32xf32>
    %5 = arith.addf %2, %4 : vector<8x32xf32>
    %cst_5 = arith.constant 0.000000e+00 : f32
    %6 = vector.broadcast %cst_5 : f32 to vector<8x32xf32>
    %7 = arith.maximumf %5, %6 : vector<8x32xf32>
    %c0_6 = arith.constant 0 : index
    %c0_7 = arith.constant 0 : index
    %8 = vector.load %arg4[%c0_6, %c0_7] : memref<32x128xf32, #tpu.memory_space<vmem>>, vector<32x128xf32>
    %cst_8 = arith.constant dense<0.000000e+00> : vector<8x128xf32>
    %9 = tpu.matmul %7, %8, %cst_8 {dimension_numbers = #tpu.dot_dimension_numbers<[1], [0], [0], [1], [0, 0, 1, 1], [], []>} : vector<8x32xf32>, vector<32x128xf32>, vector<8x128xf32> -> vector<8x128xf32>
    %c0_9 = arith.constant 0 : index
    %c0_10 = arith.constant 0 : index
    %10 = vector.load %arg5[%c0_9, %c0_10] : memref<1x128xf32, #tpu.memory_space<vmem>>, vector<1x128xf32>
    %11 = vector.broadcast %10 : vector<1x128xf32> to vector<8x128xf32>
    %12 = arith.addf %9, %11 : vector<8x128xf32>
    %c0_11 = arith.constant 0 : index
    %c0_12 = arith.constant 0 : index
    %13 = vector.load %arg6[%c0_11, %c0_12] : memref<8x128xf32, #tpu.memory_space<vmem>>, vector<8x128xf32>
    tpu.vector_store %arg6[%c0_11, %c0_12], %12 {strides = array<i32>} : memref<8x128xf32, #tpu.memory_space<vmem>>, vector<8x128xf32>,
    return
  }
  func.func @transform_0(%arg0: i32) -> (i32, i32) {
    %c0_i32 = arith.constant 0 : i32
    %c0_i32_0 = arith.constant 0 : i32
    return %arg0, %c0_i32 : i32, i32
  }
  func.func @transform_1(%arg0: i32) -> (i32, i32) {
    %c0_i32 = arith.constant 0 : i32
    %c0_i32_0 = arith.constant 0 : i32
    %c0_i32_1 = arith.constant 0 : i32
    return %c0_i32, %c0_i32_0 : i32, i32
  }
  func.func @transform_2(%arg0: i32) -> (i32, i32) {
    %c0_i32 = arith.constant 0 : i32
    %c0_i32_0 = arith.constant 0 : i32
    %c0_i32_1 = arith.constant 0 : i32
    return %c0_i32, %c0_i32_0 : i32, i32
  }
  func.func @transform_3(%arg0: i32) -> (i32, i32) {
    %c0_i32 = arith.constant 0 : i32
    %c0_i32_0 = arith.constant 0 : i32
    %c0_i32_1 = arith.constant 0 : i32
    return %c0_i32, %c0_i32_0 : i32, i32
  }
  func.func @transform_4(%arg0: i32) -> (i32, i32) {
    %c0_i32 = arith.constant 0 : i32
    %c0_i32_0 = arith.constant 0 : i32
    %c0_i32_1 = arith.constant 0 : i32
    return %c0_i32, %c0_i32_0 : i32, i32
  }
  func.func @transform_5(%arg0: i32) -> (i32, i32) {
    %c0_i32 = arith.constant 0 : i32
    %c0_i32_0 = arith.constant 0 : i32
    return %arg0, %c0_i32 : i32, i32
  }
}

</mosaic_0001>

<llo_original>
// kernel: policy_net_forward.1
$region0: #{policy_net_forward.1}
  #allocation0 [shape = 'u32[]', space=smem, size = 0x4, offset = 0x4, fixed_abs, tag = 'smem constant byte address 0x4 - core index']
  #allocation1 [shape = 'u32[144,128]{1,0:T(1,128)}', space=vmem, size = 0x12000, scoped, tag = 'internal scratch']
  %s0 = inlined_call_operand.vmem [shape: f32[8,8], index: 0, kind: input, shape index: {}]
  %s1 = inlined_call_operand.vmem [shape: f32[8,32], index: 1, kind: input, shape index: {}]
  %s2 = inlined_call_operand.vmem [shape: f32[1,32], index: 2, kind: input, shape index: {}]
  %s3 = inlined_call_operand.vmem [shape: f32[32,128], index: 3, kind: input, shape index: {}]
  %s4 = inlined_call_operand.vmem [shape: f32[1,128], index: 4, kind: input, shape index: {}]
  %s5 = inlined_call_operand.vmem [shape: f32[8,128], index: 5, kind: output, shape index: {}]
  %s6 = sld [smem:[#allocation0]]
  $region30: #{policy_net_forward.1} parent=0
    _
  %s8 = ssub.s32 1, %s6
  %s9 = scalar_select 0, %s8, %s6
  // Predicated region
  $region2: #{policy_net_forward.1} parent=0 // pred_check
    _
  $region3: #{policy_net_forward.1} parent=0 // pred_check_branch
    %11 = sbr.rel (0) target = $region5
  $region4: #{policy_net_forward.1} parent=0 // pred_region
    _
  $region5: #{policy_net_forward.1} parent=0 // pred_fallthru
    _
  // Predicated region
  $region6: #{policy_net_forward.1} parent=0 // pred_check
    _
  $region7: #{policy_net_forward.1} parent=0 // pred_check_branch
    %13 = sbr.rel (0) target = $region9
  $region8: #{policy_net_forward.1} parent=0 // pred_region
    _
  $region9: #{policy_net_forward.1} parent=0 // pred_fallthru
    _
  // Predicated region
  $region10: #{policy_net_forward.1} parent=0 // pred_check
    _
  $region11: #{policy_net_forward.1} parent=0 // pred_check_branch
    %15 = sbr.rel (0) target = $region13
  $region12: #{policy_net_forward.1} parent=0 // pred_region
    _
  $region13: #{policy_net_forward.1} parent=0 // pred_fallthru
    _
  // Predicated region
  $region14: #{policy_net_forward.1} parent=0 // pred_check
    _
  $region15: #{policy_net_forward.1} parent=0 // pred_check_branch
    %17 = sbr.rel (0) target = $region17
  $region16: #{policy_net_forward.1} parent=0 // pred_region
    _
  $region17: #{policy_net_forward.1} parent=0 // pred_fallthru
    _
  // Predicated region
  $region18: #{policy_net_forward.1} parent=0 // pred_check
    _
  $region19: #{policy_net_forward.1} parent=0 // pred_check_branch
    %19 = sbr.rel (0) target = $region21
  $region20: #{policy_net_forward.1} parent=0 // pred_region
    _
  $region21: #{policy_net_forward.1} parent=0 // pred_fallthru
    _
  %v20 = vld [vmem:[%s0] sm:$0xff]
  %v21 = vld [vmem:[%s1] sm:$0xff]
  %v22 = vld [vmem:[%s2] sm:$0x1]
  %v24 = vlaneseq
  %v25 = vshrl.u32 %v24, 7
  %v26 = vsub.s32 0, %v25
  %v27 = vrot.slane %v22, %v26
  %vm29 = vcmask 64512
  %v31 = vsel %vm29, %v20, 0
  %33 = vmatprep.subr.mxu0 0.0
  %34 = vmatpush1.msra.mxu0 %v21
  %35 = vmatprep.subr.mxu0 0.0
  %36 = vmatpush1.msra.mxu0 0.0
  %37 = vmatprep.subr.mxu0 0.0
  %38 = vmatpush1.msra.mxu0 0.0
  %39 = vmatprep.subr.mxu0 0.0
  %40 = vmatpush1.msra.mxu0 0.0
  %41 = vmatprep.subr.mxu0 0.0
  %42 = vmatpush1.msra.mxu0 0.0
  %43 = vmatprep.subr.mxu0 0.0
  %44 = vmatpush1.msra.mxu0 0.0
  %45 = vmatprep.subr.mxu0 0.0
  %46 = vmatpush1.msra.mxu0 0.0
  %47 = vmatprep.subr.mxu0 0.0
  %48 = vmatpush1.msra.mxu0 0.0
  %49 = vmatprep.subr.mxu0 0.0
  %50 = vmatpush1.msra.mxu0 0.0
  %51 = vmatprep.subr.mxu0 0.0
  %52 = vmatpush1.msra.mxu0 0.0
  %53 = vmatprep.subr.mxu0 0.0
  %54 = vmatpush1.msra.mxu0 0.0
  %55 = vmatprep.subr.mxu0 0.0
  %56 = vmatpush1.msra.mxu0 0.0
  %57 = vmatprep.subr.mxu0 0.0
  %58 = vmatpush1.msra.mxu0 0.0
  %59 = vmatprep.subr.mxu0 0.0
  %60 = vmatpush1.msra.mxu0 0.0
  %61 = vmatprep.subr.mxu0 0.0
  %62 = vmatpush1.msra.mxu0 0.0
  %63 = vmatprep.subr.mxu0 0.0
  %64 = vmatpush1.msra.mxu0 0.0
  %65 = vmatprep.subr.mxu0 0.0
  %66 = vmatpush1.msra.mxu0 0.0
  %67 = vmatprep.subr.mxu0 0.0
  %68 = vmatpush1.msra.mxu0 0.0
  %69 = vmatprep.subr.mxu0 0.0
  %70 = vmatpush1.msra.mxu0 0.0
  %71 = vmatprep.subr.mxu0 0.0
  %72 = vmatpush1.msra.mxu0 0.0
  %73 = vmatprep.subr.mxu0 0.0
  %74 = vmatpush1.msra.mxu0 0.0
  %75 = vmatprep.subr.mxu0 0.0
  %76 = vmatpush1.msra.mxu0 0.0
  %77 = vmatprep.subr.mxu0 0.0
  %78 = vmatpush1.msra.mxu0 0.0
  %79 = vmatprep.subr.mxu0 0.0
  %80 = vmatpush1.msra.mxu0 0.0
  %81 = vmatprep.subr.mxu0 0.0
  %82 = vmatpush1.msra.mxu0 0.0
  %83 = vmatprep.subr.mxu0 0.0
  %84 = vmatpush1.msra.mxu0 0.0
  %85 = vmatprep.subr.mxu0 0.0
  %86 = vmatpush1.msra.mxu0 0.0
  %87 = vmatprep.subr.mxu0 0.0
  %88 = vmatpush1.msra.mxu0 0.0
  %89 = vmatprep.subr.mxu0 0.0
  %90 = vmatpush1.msra.mxu0 0.0
  %91 = vmatprep.subr.mxu0 0.0
  %92 = vmatpush1.msra.mxu0 0.0
  %93 = vmatprep.subr.mxu0 0.0
  %94 = vmatpush1.msra.mxu0 0.0
  %95 = vmatprep.subr.mxu0 0.0
  %96 = vmatpush1.msra.mxu0 0.0
  %97 = vmatprep.mubr.f32.mxu0 0.0
  %98 = vmatmul.mubr.f32.gmra.mrb[0].mxu0 %v31
  %v99 = vpop.f32.mrb[0].mxu0
  %v100 = vadd.f32 %v27, %v99
  %v101 = vpop.f32.mrb[0].mxu0
  %102 = vdwg.mxu0
  %v103 = vmax.f32 %v100, 0.0
  %v104 = vld [vmem:[%s3] sm:$0xff]
  %v105 = vld [vmem:[%s3 + $0x8] sm:$0xff]
  %v106 = vld [vmem:[%s3 + $0x10] sm:$0xff]
  %v107 = vld [vmem:[%s3 + $0x18] sm:$0xff]
  %v108 = vld [vmem:[%s4] sm:$0x1]
  %v110 = vlaneseq
  %v111 = vshrl.u32 %v110, 7
  %v112 = vsub.s32 0, %v111
  %v113 = vrot.slane %v108, %v112
  %vm115 = vcmask 261120
  %v117 = vsel %vm115, %v103, 0
  %119 = vmatprep.subr.mxu0 0.0
  %120 = vmatpush1.msra.mxu0 %v104
  %121 = vmatprep.subr.mxu0 0.0
  %122 = vmatpush1.msra.mxu0 %v105
  %123 = vmatprep.subr.mxu0 0.0
  %124 = vmatpush1.msra.mxu0 %v106
  %125 = vmatprep.subr.mxu0 0.0
  %126 = vmatpush1.msra.mxu0 %v107
  %127 = vmatprep.subr.mxu0 0.0
  %128 = vmatpush1.msra.mxu0 0.0
  %129 = vmatprep.subr.mxu0 0.0
  %130 = vmatpush1.msra.mxu0 0.0
  %131 = vmatprep.subr.mxu0 0.0
  %132 = vmatpush1.msra.mxu0 0.0
  %133 = vmatprep.subr.mxu0 0.0
  %134 = vmatpush1.msra.mxu0 0.0
  %135 = vmatprep.subr.mxu0 0.0
  %136 = vmatpush1.msra.mxu0 0.0
  %137 = vmatprep.subr.mxu0 0.0
  %138 = vmatpush1.msra.mxu0 0.0
  %139 = vmatprep.subr.mxu0 0.0
  %140 = vmatpush1.msra.mxu0 0.0
  %141 = vmatprep.subr.mxu0 0.0
  %142 = vmatpush1.msra.mxu0 0.0
  %143 = vmatprep.subr.mxu0 0.0
  %144 = vmatpush1.msra.mxu0 0.0
  %145 = vmatprep.subr.mxu0 0.0
  %146 = vmatpush1.msra.mxu0 0.0
  %147 = vmatprep.subr.mxu0 0.0
  %148 = vmatpush1.msra.mxu0 0.0
  %149 = vmatprep.subr.mxu0 0.0
  %150 = vmatpush1.msra.mxu0 0.0
  %151 = vmatprep.subr.mxu0 0.0
  %152 = vmatpush1.msra.mxu0 0.0
  %153 = vmatprep.subr.mxu0 0.0
  %154 = vmatpush1.msra.mxu0 0.0
  %155 = vmatprep.subr.mxu0 0.0
  %156 = vmatpush1.msra.mxu0 0.0
  %157 = vmatprep.subr.mxu0 0.0
  %158 = vmatpush1.msra.mxu0 0.0
  %159 = vmatprep.subr.mxu0 0.0
  %160 = vmatpush1.msra.mxu0 0.0
  %161 = vmatprep.subr.mxu0 0.0
  %162 = vmatpush1.msra.mxu0 0.0
  %163 = vmatprep.subr.mxu0 0.0
  %164 = vmatpush1.msra.mxu0 0.0
  %165 = vmatprep.subr.mxu0 0.0
  %166 = vmatpush1.msra.mxu0 0.0
  %167 = vmatprep.subr.mxu0 0.0
  %168 = vmatpush1.msra.mxu0 0.0
  %169 = vmatprep.subr.mxu0 0.0
  %170 = vmatpush1.msra.mxu0 0.0
  %171 = vmatprep.subr.mxu0 0.0
  %172 = vmatpush1.msra.mxu0 0.0
  %173 = vmatprep.subr.mxu0 0.0
  %174 = vmatpush1.msra.mxu0 0.0
  %175 = vmatprep.subr.mxu0 0.0
  %176 = vmatpush1.msra.mxu0 0.0
  %177 = vmatprep.subr.mxu0 0.0
  %178 = vmatpush1.msra.mxu0 0.0
  %179 = vmatprep.subr.mxu0 0.0
  %180 = vmatpush1.msra.mxu0 0.0
  %181 = vmatprep.subr.mxu0 0.0
  %182 = vmatpush1.msra.mxu0 0.0
  %183 = vmatprep.mubr.f32.mxu0 0.0
  %184 = vmatmul.mubr.f32.gmra.mrb[0].mxu0 %v117
  %v185 = vpop.f32.mrb[0].mxu0
  %v186 = vadd.f32 %v113, %v185
  %v187 = vpop.f32.mrb[0].mxu0
  %188 = vdwg.mxu0
  %189 = vst [vmem:[%s5] sm:$0xff] %v186
  // Predicated region
  $region22: #{policy_net_forward.1} parent=0 // pred_check
    _
  $region23: #{policy_net_forward.1} parent=0 // pred_check_branch
    %191 = sbr.rel (0) target = $region25
  $region24: #{policy_net_forward.1} parent=0 // pred_region
    _
  $region25: #{policy_net_forward.1} parent=0 // pred_fallthru
    _
  // Predicated region
  $region26: #{policy_net_forward.1} parent=0 // pred_check
    _
  $region27: #{policy_net_forward.1} parent=0 // pred_check_branch
    %193 = sbr.rel (0) target = $region29
  $region28: #{policy_net_forward.1} parent=0 // pred_region
    _
  $region29: #{policy_net_forward.1} parent=0 // pred_fallthru
    _

</llo_original>
